<compile_context>
chip_gen: v5e
topology: v5e:2x2
jax: 0.10.0
libtpu: 0.0.40
codegen_flags: <defaults>
</compile_context>

<pallas_src>
import functools

import jax
import jax.numpy as jnp
from jax import lax
from jax.experimental import pallas as pl
from jax.experimental.pallas import tpu as pltpu


_FP8 = getattr(jnp, "float8_e4m3fn", jnp.bfloat16)

# Per-generation config: operand dtype, MXU accumulator dtype, tile sizes, VMEM cap.
_CHIP_CONFIGS = {
    "v5e": dict(op_dtype=jnp.int8, acc_dtype=jnp.int32,
                tn=512, tm=1024, tl=2048, vmem_limit_bytes=64 << 20),
    "v6e": dict(op_dtype=jnp.int8, acc_dtype=jnp.int32,
                tn=1024, tm=2048, tl=2048, vmem_limit_bytes=96 << 20),
    "v7x": dict(op_dtype=_FP8, acc_dtype=jnp.float32,
                tn=1024, tm=1024, tl=2048, vmem_limit_bytes=48 << 20),
    # v4 / v5p / unknown / interpret: conservative bf16 tiling, default VMEM limit.
    "other": dict(op_dtype=jnp.bfloat16, acc_dtype=jnp.float32,
                  tn=512, tm=1024, tl=1024, vmem_limit_bytes=None),
}


def _round_up(x, m):
    return (x + m - 1) // m * m


def _tpu_generation():
    try:
        kind = jax.devices()[0].device_kind.lower().replace(" ", "")
    except Exception:
        return "other"
    if "v5lite" in kind or "v5e" in kind:
        return "v5e"
    if "v6" in kind:
        return "v6e"
    if "7x" in kind or "v7" in kind:
        return "v7x"
    return "other"


def _epik_rbf_kernel(a1_ref, a2t_ref, c1_ref, c2_ref, out_ref, *,
                     two_over_l, tl, a1_is_panel, acc_dtype):
    """One (row-tile i, col-tile j, loci-tile k) grid step.

    a1_ref : (tn, tl) or (tn, Lp) narrow-dtype tile/panel of (1 - geno1), values {-1,0,1}
    a2t_ref: (tl, tm)             narrow-dtype tile of (1 - geno2).T
    c1_ref : (tn, 1)  f32         (het_count_1 - L) / L
    c2_ref : (1, tm)  f32         (het_count_2 - L) / L
    out_ref: (tn, tm) f32         output tile; doubles as the Q accumulator across k.
    """
    k = pl.program_id(2)

    if a1_is_panel:
        # Full row panel is VMEM-resident; slice the current loci window.
        a1 = a1_ref[:, pl.ds(pl.multiple_of(k * tl, 128), tl)]
    else:
        a1 = a1_ref[...]

    # (tn, tl) x (tl, tm) -> (tn, tm) on the MXU in its natural (M,K)x(K,N)
    # orientation; int8 -> int32 or fp8/bf16 -> f32 accumulation.
    q = lax.dot_general(
        a1, a2t_ref[...], (((1,), (0,)), ((), ())),
        preferred_element_type=acc_dtype,
    ).astype(jnp.float32)

    # Accumulate directly in the resident output block (ordering matters when
    # the reduction has a single step: init, accumulate, finalize).
    @pl.when(k == 0)
    def _():
        out_ref[...] = q

    @pl.when(k > 0)
    def _():
        out_ref[...] += q

    @pl.when(k == pl.num_programs(2) - 1)
    def _():
        out_ref[...] = jnp.exp(
            c1_ref[...] + c2_ref[...] + jnp.float32(two_over_l) * out_ref[...]
        ).astype(out_ref.dtype)


def epik_rbf_forward(geno1, geno2, *, tile_n=None, tile_m=None, tile_l=None):
    """Pallas implementation of RBFKernel.forward(geno1, geno2) -> [N, M]."""
    N, L = geno1.shape
    M, L2 = geno2.shape
    assert L == L2, "geno1 / geno2 must have the same number of loci"
    # TODO(synk): the PyTorch forward references a module-level global `L`; we
    # interpret it as geno1.shape[1] (number of loci), as in the helper d().
    # NOTE: the h0 - h1 = 1 - g reduction is exact only for hard calls in {0,1,2}.

    gen = _tpu_generation()
    cfg = _CHIP_CONFIGS[gen]
    op_dtype, acc_dtype = cfg["op_dtype"], cfg["acc_dtype"]
    op_bytes = jnp.dtype(op_dtype).itemsize

    tn = tile_n if tile_n is not None else cfg["tn"]
    tm = tile_m if tile_m is not None else cfg["tm"]
    tl = tile_l if tile_l is not None else cfg["tl"]

    # Tile rounding matched to the packed layout of the operand dtype
    # (8-bit operands: (32, 128) native tile; bf16: (16, 128)).
    sub = 32 if op_bytes == 1 else 16
    tn = _round_up(max(sub, min(tn, _round_up(N, sub))), sub)
    tm = _round_up(max(128, min(tm, _round_up(M, 128))), 128)
    tl = _round_up(max(128, min(tl, _round_up(L, 128))), 128)
    Np, Mp, Lp = _round_up(N, tn), _round_up(M, tm), _round_up(L, tl)

    # v7x has 2 TensorCores: keep the parallel grid axes' combined extent >= 2
    # when the problem can be split, so megacore sharding has work for both.
    if gen == "v7x":
        while (Np // tn) * (Mp // tm) < 2 and tm > 128 and M > tm // 2:
            tm //= 2
            Mp = _round_up(M, tm)

    # Keep the a1 row panel fully VMEM-resident (DMA'd once per row tile, never
    # re-streamed across the j / k sweep) when it is small enough.
    a1_is_panel = (Lp > tl) and (tn * Lp * op_bytes) <= (4 << 20)

    # Wrapper-side prep is O((N+M)*L) elementwise only; the O(N*M*L) matmul
    # lives in the kernel. {-1,0,1} and het counts are exact in every dtype used.
    g1 = geno1.astype(jnp.float32)
    g2 = geno2.astype(jnp.float32)
    a1 = (1.0 - g1).astype(op_dtype)                    # (N, L), values in {-1,0,1}
    a2t = jnp.transpose(1.0 - g2).astype(op_dtype)      # (L, M), MXU-natural RHS
    Lf = jnp.float32(L)
    r1 = jnp.sum((g1 == 1.0).astype(jnp.float32), axis=1)
    r2 = jnp.sum((g2 == 1.0).astype(jnp.float32), axis=1)
    c1 = ((r1 - Lf) / Lf).reshape(N, 1).astype(jnp.float32)
    c2 = ((r2 - Lf) / Lf).reshape(1, M).astype(jnp.float32)

    # Zero-pad: padded loci add zero terms to Q; padded rows/cols are sliced off.
    a1 = jnp.pad(a1, ((0, Np - N), (0, Lp - L)))
    a2t = jnp.pad(a2t, ((0, Lp - L), (0, Mp - M)))
    c1 = jnp.pad(c1, ((0, Np - N), (0, 0)))
    c2 = jnp.pad(c2, ((0, 0), (0, Mp - M)))

    kernel = functools.partial(
        _epik_rbf_kernel, two_over_l=2.0 / L, tl=tl,
        a1_is_panel=a1_is_panel, acc_dtype=acc_dtype)

    a1_block = (tn, Lp) if a1_is_panel else (tn, tl)
    a1_index = (lambda i, j, k: (i, 0)) if a1_is_panel else (lambda i, j, k: (i, k))

    grid_spec = pltpu.PrefetchScalarGridSpec(
        num_scalar_prefetch=0,
        grid=(Np // tn, Mp // tm, Lp // tl),
        in_specs=[
            pl.BlockSpec(a1_block, a1_index),                 # (1 - geno1) tile/panel
            pl.BlockSpec((tl, tm), lambda i, j, k: (k, j)),   # (1 - geno2).T tile
            pl.BlockSpec((tn, 1), lambda i, j, k: (i, 0)),    # row coefficients
            pl.BlockSpec((1, tm), lambda i, j, k: (0, j)),    # column coefficients
        ],
        out_specs=pl.BlockSpec((tn, tm), lambda i, j, k: (i, j)),
    )

    cp_kwargs = dict(dimension_semantics=("parallel", "parallel", "arbitrary"))
    if cfg["vmem_limit_bytes"] is not None:
        cp_kwargs["vmem_limit_bytes"] = cfg["vmem_limit_bytes"]

    out = pl.pallas_call(
        kernel,
        out_shape=jax.ShapeDtypeStruct((Np, Mp), jnp.float32),
        grid_spec=grid_spec,
        compiler_params=pltpu.CompilerParams(**cp_kwargs),
    )(a1, a2t, c1, c2)

    return out[:N, :M]


def epik_rbf_reference(geno1, geno2):
    """Plain-JAX port of the PyTorch RBFKernel.forward (the spec)."""
    L = geno1.shape[1]
    g1 = geno1.astype(jnp.float32)
    g2 = geno2.astype(jnp.float32)
    g1_ht = (g1 == 1.0).astype(jnp.float32)
    g2_ht = (g2 == 1.0).astype(jnp.float32)
    g1_h0 = (g1 == 0.0).astype(jnp.float32)
    g1_h1 = (g1 == 2.0).astype(jnp.float32)
    g2_h0 = (g2 == 0.0).astype(jnp.float32)
    g2_h1 = (g2 == 2.0).astype(jnp.float32)
    S1 = g1_ht @ g2_ht.T
    S2 = g1_h0 @ g2_h0.T + g1_h1 @ g2_h1.T
    D2 = g1_h0 @ g2_h1.T + g1_h1 @ g2_h0.T
    D1 = L - S1 - S2 - D2
    diff = (D1 + 4.0 * D2) / L
    return jnp.exp(-diff)


if __name__ == "__main__":
    key = jax.random.PRNGKey(0)
    k1, k2, k3, k4 = jax.random.split(key, 4)

    # Small genotype matrices, entries in {0, 1, 2}.
    N, M, L = 16, 16, 256
    geno1 = jax.random.randint(k1, (N, L), 0, 3).astype(jnp.float32)
    geno2 = jax.random.randint(k2, (M, L), 0, 3).astype(jnp.float32)

    out = jax.block_until_ready(epik_rbf_forward(geno1, geno2))
    ref = epik_rbf_reference(geno1, geno2)
    assert out.shape == (N, M)
    assert jnp.allclose(out, ref, rtol=1e-5, atol=1e-6), "mismatch vs reference"

    # Exercise the multi-step reduction and the VMEM-resident a1-panel path.
    N2, M2, L2 = 48, 160, 512
    geno1b = jax.random.randint(k3, (N2, L2), 0, 3).astype(jnp.float32)
    geno2b = jax.random.randint(k4, (M2, L2), 0, 3).astype(jnp.float32)
    out2 = jax.block_until_ready(
        epik_rbf_forward(geno1b, geno2b, tile_n=32, tile_m=128, tile_l=128))
    ref2 = epik_rbf_reference(geno1b, geno2b)
    assert out2.shape == (N2, M2)
    assert jnp.allclose(out2, ref2, rtol=1e-5, atol=1e-6), "mismatch vs reference (tiled)"

    print("KERNEL_OK")
</pallas_src>

<mosaic_0001>
module attributes {stable_mosaic.version = 11 : i64} {
  func.func @_epik_rbf_kernel(%arg0: i32, %arg1: i32, %arg2: i32, %arg3: memref<16x256xbf16, #tpu.memory_space<vmem>>, %arg4: memref<256x128xbf16, #tpu.memory_space<vmem>>, %arg5: memref<16x1xf32, #tpu.memory_space<vmem>>, %arg6: memref<1x128xf32, #tpu.memory_space<vmem>>, %arg7: memref<16x128xf32, #tpu.memory_space<vmem>>) attributes {dimension_semantics = [#tpu.dimension_semantics<parallel>, #tpu.dimension_semantics<parallel>, #tpu.dimension_semantics<arbitrary>], iteration_bounds = array<i64: 1, 1, 1>, scalar_prefetch = 0 : i64, scratch_operands = 0 : i64, tpu.core_type = #tpu.core_type<tc>, window_params = [{transform_indices = @transform_0, window_bounds = array<i64: 16, 256>}, {transform_indices = @transform_1, window_bounds = array<i64: 256, 128>}, {transform_indices = @transform_2, window_bounds = array<i64: 16, 1>}, {transform_indices = @transform_3, window_bounds = array<i64: 1, 128>}, {transform_indices = @transform_4, window_bounds = array<i64: 16, 128>}]} {
    %c0 = arith.constant 0 : index
    %c0_0 = arith.constant 0 : index
    %0 = vector.load %arg3[%c0, %c0_0] : memref<16x256xbf16, #tpu.memory_space<vmem>>, vector<16x256xbf16>
    %c0_1 = arith.constant 0 : index
    %c0_2 = arith.constant 0 : index
    %1 = vector.load %arg4[%c0_1, %c0_2] : memref<256x128xbf16, #tpu.memory_space<vmem>>, vector<256x128xbf16>
    %cst = arith.constant dense<0.000000e+00> : vector<16x128xf32>
    %2 = tpu.matmul %0, %1, %cst {dimension_numbers = #tpu.dot_dimension_numbers<[1], [0], [0], [1], [0, 0, 1, 1], [], []>} : vector<16x256xbf16>, vector<256x128xbf16>, vector<16x128xf32> -> vector<16x128xf32>
    %c0_i32 = arith.constant 0 : i32
    %3 = arith.cmpi eq, %arg2, %c0_i32 : i32
    %4 = arith.extui %3 : i1 to i32
    %c0_i32_3 = arith.constant 0 : i32
    %5 = arith.cmpi ne, %4, %c0_i32_3 : i32
    scf.if %5 {
      %c0_8 = arith.constant 0 : index
      %c0_9 = arith.constant 0 : index
      %12 = vector.load %arg7[%c0_8, %c0_9] : memref<16x128xf32, #tpu.memory_space<vmem>>, vector<16x128xf32>
      tpu.vector_store %arg7[%c0_8, %c0_9], %2 {strides = array<i32>} : memref<16x128xf32, #tpu.memory_space<vmem>>, vector<16x128xf32>,
    } else {
    }
    %c0_i32_4 = arith.constant 0 : i32
    %6 = arith.cmpi sgt, %arg2, %c0_i32_4 : i32
    %7 = arith.extui %6 : i1 to i32
    %c0_i32_5 = arith.constant 0 : i32
    %8 = arith.cmpi ne, %7, %c0_i32_5 : i32
    scf.if %8 {
      %c0_8 = arith.constant 0 : index
      %c0_9 = arith.constant 0 : index
      %12 = vector.load %arg7[%c0_8, %c0_9] : memref<16x128xf32, #tpu.memory_space<vmem>>, vector<16x128xf32>
      %13 = arith.addf %12, %2 : vector<16x128xf32>
      %c0_10 = arith.constant 0 : index
      %c0_11 = arith.constant 0 : index
      %14 = vector.load %arg7[%c0_10, %c0_11] : memref<16x128xf32, #tpu.memory_space<vmem>>, vector<16x128xf32>
      tpu.vector_store %arg7[%c0_10, %c0_11], %13 {strides = array<i32>} : memref<16x128xf32, #tpu.memory_space<vmem>>, vector<16x128xf32>,
    } else {
    }
    %c0_i32_6 = arith.constant 0 : i32
    %9 = arith.cmpi eq, %arg2, %c0_i32_6 : i32
    %10 = arith.extui %9 : i1 to i32
    %c0_i32_7 = arith.constant 0 : i32
    %11 = arith.cmpi ne, %10, %c0_i32_7 : i32
    scf.if %11 {
      %c0_8 = arith.constant 0 : index
      %c0_9 = arith.constant 0 : index
      %12 = vector.load %arg5[%c0_8, %c0_9] : memref<16x1xf32, #tpu.memory_space<vmem>>, vector<16x1xf32>
      %c0_10 = arith.constant 0 : index
      %c0_11 = arith.constant 0 : index
      %13 = vector.load %arg6[%c0_10, %c0_11] : memref<1x128xf32, #tpu.memory_space<vmem>>, vector<1x128xf32>
      %14 = vector.broadcast %12 : vector<16x1xf32> to vector<16x128xf32>
      %15 = vector.broadcast %13 : vector<1x128xf32> to vector<16x128xf32>
      %16 = arith.addf %14, %15 : vector<16x128xf32>
      %c0_12 = arith.constant 0 : index
      %c0_13 = arith.constant 0 : index
      %17 = vector.load %arg7[%c0_12, %c0_13] : memref<16x128xf32, #tpu.memory_space<vmem>>, vector<16x128xf32>
      %cst_14 = arith.constant 7.812500e-03 : f32
      %18 = vector.broadcast %cst_14 : f32 to vector<16x128xf32>
      %19 = arith.mulf %18, %17 : vector<16x128xf32>
      %20 = arith.addf %16, %19 : vector<16x128xf32>
      %21 = math.exp %20 : vector<16x128xf32>
      %c0_15 = arith.constant 0 : index
      %c0_16 = arith.constant 0 : index
      %22 = vector.load %arg7[%c0_15, %c0_16] : memref<16x128xf32, #tpu.memory_space<vmem>>, vector<16x128xf32>
      tpu.vector_store %arg7[%c0_15, %c0_16], %21 {strides = array<i32>} : memref<16x128xf32, #tpu.memory_space<vmem>>, vector<16x128xf32>,
    } else {
    }
    return
  }
  func.func @transform_0(%arg0: i32, %arg1: i32, %arg2: i32) -> (i32, i32) {
    %c0_i32 = arith.constant 0 : i32
    return %arg0, %arg2 : i32, i32
  }
  func.func @transform_1(%arg0: i32, %arg1: i32, %arg2: i32) -> (i32, i32) {
    %c0_i32 = arith.constant 0 : i32
    return %arg2, %arg1 : i32, i32
  }
  func.func @transform_2(%arg0: i32, %arg1: i32, %arg2: i32) -> (i32, i32) {
    %c0_i32 = arith.constant 0 : i32
    %c0_i32_0 = arith.constant 0 : i32
    return %arg0, %c0_i32 : i32, i32
  }
  func.func @transform_3(%arg0: i32, %arg1: i32, %arg2: i32) -> (i32, i32) {
    %c0_i32 = arith.constant 0 : i32
    %c0_i32_0 = arith.constant 0 : i32
    return %c0_i32, %arg1 : i32, i32
  }
  func.func @transform_4(%arg0: i32, %arg1: i32, %arg2: i32) -> (i32, i32) {
    %c0_i32 = arith.constant 0 : i32
    return %arg0, %arg1 : i32, i32
  }
}

</mosaic_0001>

<llo_original>
// kernel: tpu_custom_call.1
$region0: #{tpu_custom_call.1}
  #allocation0 [shape = 'u32[]', space=smem, size = 0x4, offset = 0x4, fixed_abs, tag = 'smem constant byte address 0x4 - core index']
  #allocation1 [shape = 'u32[72,128]{1,0:T(1,128)}', space=vmem, size = 0x9000, scoped, tag = 'internal scratch']
  %s0 = inlined_call_operand.vmem [shape: bf16[16,256], index: 0, kind: input, shape index: {}]
  %s1 = inlined_call_operand.hbm [shape: bf16[256,128], index: 1, kind: input, shape index: {}]
  %s2 = inlined_call_operand.vmem [shape: f32[16,1], index: 2, kind: input, shape index: {}]
  %s3 = inlined_call_operand.vmem [shape: f32[1,128], index: 3, kind: input, shape index: {}]
  %s4 = inlined_call_operand.hbm [shape: f32[16,128], index: 4, kind: output, shape index: {}]
  %s5 = sld [smem:[#allocation0]]
  $region42: #{tpu_custom_call.1} parent=0
    _
  %s7 = ssub.s32 1, %s5
  %s8 = scalar_select 0, %s7, %s5
  $region1: #{tpu_custom_call.1} parent=0
    #allocation2 [shape = 'u8[65536]{0}', space=vmem, size = 0x10000, scoped, tag = 'input window, operand 1, single buffered']
    #allocation3 [shape = 's32[1]{0}', space=sflag, size = 0x4, scoped, tag = 'scoped memory for tpu_custom_call.1']
    #allocation4 [shape = 's32[1]{0}', space=sflag, size = 0x4, scoped, tag = 'scoped memory for tpu_custom_call.1']
    #allocation5 [shape = 'u8[8192]{0}', space=vmem, size = 0x2000, scoped, tag = 'output window, operand 0, single buffered']
    %9 = vsyncpa [#allocation3], 0
    %10 = vsyncpa [#allocation4], 0
    // Predicated region
    $region2: #{tpu_custom_call.1} parent=1 // pred_check
      _
    $region3: #{tpu_custom_call.1} parent=1 // pred_check_branch
      %12 = sbr.rel (0) target = $region5
    $region4: #{tpu_custom_call.1} parent=1 // pred_region
      _
    $region5: #{tpu_custom_call.1} parent=1 // pred_fallthru
      _
    // Predicated region
    $region6: #{tpu_custom_call.1} parent=1 // pred_check
      _
    $region7: #{tpu_custom_call.1} parent=1 // pred_check_branch
      %14 = sbr.rel (0) target = $region9
    $region8: #{tpu_custom_call.1} parent=1 // pred_region
      %16 = vsyncadd [#allocation3], 0
      %s17 = sshll.u32 %s1, 4
      %s18 = int_to_ptr.hbm [resolvable:$true] %s17
      %s19 = sshll.u32 [#allocation2], 4
      %s20 = int_to_ptr.vmem [resolvable:$true] %s19
      %25 = dma.hbm_to_vmem [thread:$0]  %s18, 2048, %s20, [#allocation3], 64, 64, 4
    $region9: #{tpu_custom_call.1} parent=1 // pred_fallthru
      _
    // Predicated region
    $region10: #{tpu_custom_call.1} parent=1 // pred_check
      _
    $region11: #{tpu_custom_call.1} parent=1 // pred_check_branch
      %27 = sbr.rel (0) target = $region13
    $region12: #{tpu_custom_call.1} parent=1 // pred_region
      _
    $region13: #{tpu_custom_call.1} parent=1 // pred_fallthru
      _
    // Predicated region
    $region14: #{tpu_custom_call.1} parent=1 // pred_check
      _
    $region15: #{tpu_custom_call.1} parent=1 // pred_check_branch
      %29 = sbr.rel (0) target = $region17
    $region16: #{tpu_custom_call.1} parent=1 // pred_region
      _
    $region17: #{tpu_custom_call.1} parent=1 // pred_fallthru
      _
    // Predicated region
    $region18: #{tpu_custom_call.1} parent=1 // pred_check
      _
    $region19: #{tpu_custom_call.1} parent=1 // pred_check_branch
      %31 = sbr.rel (0) target = $region21
    $region20: #{tpu_custom_call.1} parent=1 // pred_region
      %33 = dma.done [#allocation3], 2048
    $region21: #{tpu_custom_call.1} parent=1 // pred_fallthru
      _
    %v34 = vld [vmem:[%s0] sm:$0xff]
    %v35 = vld [vmem:[%s0 + $0x8] sm:$0xff]
    %v36 = vld [vmem:[#allocation2] sm:$0xf]
    %v37 = vld [vmem:[#allocation2 + $0x4] sm:$0xf]
    %v38 = vld [vmem:[#allocation2 + $0x8] sm:$0xf]
    %v39 = vld [vmem:[#allocation2 + $0xc] sm:$0xf]
    %v40 = vld [vmem:[#allocation2 + $0x10] sm:$0xf]
    %v41 = vld [vmem:[#allocation2 + $0x14] sm:$0xf]
    %v42 = vld [vmem:[#allocation2 + $0x18] sm:$0xf]
    %v43 = vld [vmem:[#allocation2 + $0x1c] sm:$0xf]
    %v44 = vld [vmem:[#allocation2 + $0x20] sm:$0xf]
    %v45 = vld [vmem:[#allocation2 + $0x24] sm:$0xf]
    %v46 = vld [vmem:[#allocation2 + $0x28] sm:$0xf]
    %v47 = vld [vmem:[#allocation2 + $0x2c] sm:$0xf]
    %v48 = vld [vmem:[#allocation2 + $0x30] sm:$0xf]
    %v49 = vld [vmem:[#allocation2 + $0x34] sm:$0xf]
    %v50 = vld [vmem:[#allocation2 + $0x38] sm:$0xf]
    %v51 = vld [vmem:[#allocation2 + $0x3c] sm:$0xf]
    %v52 = vld [vmem:[#allocation2 + $0x40] sm:$0xf]
    %v53 = vld [vmem:[#allocation2 + $0x44] sm:$0xf]
    %v54 = vld [vmem:[#allocation2 + $0x48] sm:$0xf]
    %v55 = vld [vmem:[#allocation2 + $0x4c] sm:$0xf]
    %v56 = vld [vmem:[#allocation2 + $0x50] sm:$0xf]
    %v57 = vld [vmem:[#allocation2 + $0x54] sm:$0xf]
    %v58 = vld [vmem:[#allocation2 + $0x58] sm:$0xf]
    %v59 = vld [vmem:[#allocation2 + $0x5c] sm:$0xf]
    %v60 = vld [vmem:[#allocation2 + $0x60] sm:$0xf]
    %v61 = vld [vmem:[#allocation2 + $0x64] sm:$0xf]
    %v62 = vld [vmem:[#allocation2 + $0x68] sm:$0xf]
    %v63 = vld [vmem:[#allocation2 + $0x6c] sm:$0xf]
    %v64 = vld [vmem:[#allocation2 + $0x70] sm:$0xf]
    %v65 = vld [vmem:[#allocation2 + $0x74] sm:$0xf]
    %v66 = vld [vmem:[#allocation2 + $0x78] sm:$0xf]
    %v67 = vld [vmem:[#allocation2 + $0x7c] sm:$0xf]
    %v70 = vunpack.c.l.b16 %v34
    %v71 = vunpack.c.h.b16 %v34
    %v72 = vunpack.c.l.b16 %v35
    %v73 = vunpack.c.h.b16 %v35
    %v74 = vpack.c.b16 %v72, %v70
    %v75 = vpack.c.b16 %v73, %v71
    %v110 = vunpack.c.l.b16 %v36
    %v111 = vunpack.c.l.b16 %v37
    %v112 = vunpack.c.l.b16 %v38
    %v113 = vunpack.c.l.b16 %v39
    %v114 = vunpack.c.l.b16 %v40
    %v115 = vunpack.c.l.b16 %v41
    %v116 = vunpack.c.l.b16 %v42
    %v117 = vunpack.c.l.b16 %v43
    %v118 = vunpack.c.l.b16 %v44
    %v119 = vunpack.c.l.b16 %v45
    %v120 = vunpack.c.l.b16 %v46
    %v121 = vunpack.c.l.b16 %v47
    %v122 = vunpack.c.l.b16 %v48
    %v123 = vunpack.c.l.b16 %v49
    %v124 = vunpack.c.l.b16 %v50
    %v125 = vunpack.c.l.b16 %v51
    %v126 = vunpack.c.l.b16 %v52
    %v127 = vunpack.c.l.b16 %v53
    %v128 = vunpack.c.l.b16 %v54
    %v129 = vunpack.c.l.b16 %v55
    %v130 = vunpack.c.l.b16 %v56
    %v131 = vunpack.c.l.b16 %v57
    %v132 = vunpack.c.l.b16 %v58
    %v133 = vunpack.c.l.b16 %v59
    %v134 = vunpack.c.l.b16 %v60
    %v135 = vunpack.c.l.b16 %v61
    %v136 = vunpack.c.l.b16 %v62
    %v137 = vunpack.c.l.b16 %v63
    %v138 = vunpack.c.l.b16 %v64
    %v139 = vunpack.c.l.b16 %v65
    %v140 = vunpack.c.l.b16 %v66
    %v141 = vunpack.c.l.b16 %v67
    %v142 = vpack.c.b16 %v111, %v110
    %v143 = vpack.c.b16 %v113, %v112
    %v144 = vpack.c.b16 %v115, %v114
    %v145 = vpack.c.b16 %v117, %v116
    %v146 = vpack.c.b16 %v119, %v118
    %v147 = vpack.c.b16 %v121, %v120
    %v148 = vpack.c.b16 %v123, %v122
    %v149 = vpack.c.b16 %v125, %v124
    %v150 = vpack.c.b16 %v127, %v126
    %v151 = vpack.c.b16 %v129, %v128
    %v152 = vpack.c.b16 %v131, %v130
    %v153 = vpack.c.b16 %v133, %v132
    %v154 = vpack.c.b16 %v135, %v134
    %v155 = vpack.c.b16 %v137, %v136
    %v156 = vpack.c.b16 %v139, %v138
    %v157 = vpack.c.b16 %v141, %v140
    %174 = vmatpush.bf16.msra.mxu0 %v149
    %175 = vmatpush.bf16.msra.mxu0 %v148
    %176 = vmatpush.bf16.msra.mxu0 %v147
    %177 = vmatpush.bf16.msra.mxu0 %v146
    %178 = vmatpush.bf16.msra.mxu0 %v145
    %179 = vmatpush.bf16.msra.mxu0 %v144
    %180 = vmatpush.bf16.msra.mxu0 %v143
    %181 = vmatpush.bf16.msra.mxu0 %v142
    %182 = vmatmul.bf16.gmra.mxu0 %v74
    %v183 = vpop.f32.mrf.mxu0
    %v184 = vadd.f32 0.0, %v183
    %v185 = vpop.f32.mrf.mxu0
    %v186 = vadd.f32 0.0, %v185
    %187 = vdwg.mxu0
    %188 = vmatpush.bf16.msra.mxu0 %v157
    %189 = vmatpush.bf16.msra.mxu0 %v156
    %190 = vmatpush.bf16.msra.mxu0 %v155
    %191 = vmatpush.bf16.msra.mxu0 %v154
    %192 = vmatpush.bf16.msra.mxu0 %v153
    %193 = vmatpush.bf16.msra.mxu0 %v152
    %194 = vmatpush.bf16.msra.mxu0 %v151
    %195 = vmatpush.bf16.msra.mxu0 %v150
    %196 = vmatmul.bf16.gmra.mxu0 %v75
    %v197 = vpop.f32.mrf.mxu0
    %v198 = vadd.f32 %v184, %v197
    %v199 = vpop.f32.mrf.mxu0
    %v200 = vadd.f32 %v186, %v199
    %201 = vdwg.mxu0
    %p202 = scmp.eq.s32.totalorder 0, 0
    // Predicated region
    $region22: #{tpu_custom_call.1} parent=1 // pred_check
      %p203 = pneg %p202
    $region23: #{tpu_custom_call.1} parent=1 // pred_check_branch
      %205 = sbr.rel (%p203) target = $region25
    $region24: #{tpu_custom_call.1} parent=1 // pred_region
      %206 = vst [vmem:[#allocation5] sm:$0xff] %v198
      %207 = vst [vmem:[#allocation5 + $0x8] sm:$0xff] %v200
    $region25: #{tpu_custom_call.1} parent=1 // pred_fallthru
      _
    %p208 = scmp.gt.s32.totalorder 0, 0
    // Predicated region
    $region26: #{tpu_custom_call.1} parent=1 // pred_check
      %p209 = pneg %p208
    $region27: #{tpu_custom_call.1} parent=1 // pred_check_branch
      %211 = sbr.rel (%p209) target = $region29
    $region28: #{tpu_custom_call.1} parent=1 // pred_region
      %v212 = vld [vmem:[#allocation5] sm:$0xff]
      %v213 = vld [vmem:[#allocation5 + $0x8] sm:$0xff]
      %v214 = vadd.f32 %v212, %v198
      %v215 = vadd.f32 %v213, %v200
      %216 = vst [vmem:[#allocation5] sm:$0xff] %v214
      %217 = vst [vmem:[#allocation5 + $0x8] sm:$0xff] %v215
    $region29: #{tpu_custom_call.1} parent=1 // pred_fallthru
      _
    // Predicated region
    $region30: #{tpu_custom_call.1} parent=1 // pred_check
      %p218 = pneg %p202
    $region31: #{tpu_custom_call.1} parent=1 // pred_check_branch
      %220 = sbr.rel (%p218) target = $region33
    $region32: #{tpu_custom_call.1} parent=1 // pred_region
      %v221 = vld [vmem:[%s2] sm:$0xff]
      %v222 = vld [vmem:[%s2 + $0x8] sm:$0xff]
      %v223 = vld [vmem:[%s3] sm:$0x1]
      %225 = vset.pattern.permute.xlu0 0
      %226 = vperm.xlu0 %225, %v221
      %v227 = vpop.permute.xlu0 %226
      %230 = vset.pattern.permute.xlu0 0
      %231 = vperm.xlu0 %230, %v222
      %v232 = vpop.permute.xlu0 %231
      %v235 = vperm.slane %v223, 0
      %v237 = vadd.f32 %v227, %v235
      %v238 = vadd.f32 %v232, %v235
      %v239 = vld [vmem:[#allocation5] sm:$0xff]
      %v240 = vld [vmem:[#allocation5 + $0x8] sm:$0xff]
      %v241 = vmul.f32 %v239, 0.0078125
      %v242 = vmul.f32 %v240, 0.0078125
      %v243 = vadd.f32 %v237, %v241
      %v244 = vadd.f32 %v238, %v242
      %v245 = vmul.f32 %v243, 1.442695
      %v246 = vpow.pop %v245
      %v247 = vmul.f32 %v244, 1.442695
      %v248 = vpow.pop %v247
      %249 = vst [vmem:[#allocation5] sm:$0xff] %v246
      %250 = vst [vmem:[#allocation5 + $0x8] sm:$0xff] %v248
    $region33: #{tpu_custom_call.1} parent=1 // pred_fallthru
      _
    // Predicated region
    $region34: #{tpu_custom_call.1} parent=1 // pred_check
      _
    $region35: #{tpu_custom_call.1} parent=1 // pred_check_branch
      %252 = sbr.rel (0) target = $region37
    $region36: #{tpu_custom_call.1} parent=1 // pred_region
      %254 = vsyncadd [#allocation4], 0
      %s255 = sshll.u32 [#allocation5], 4
      %s256 = int_to_ptr.vmem [resolvable:$true] %s255
      %s257 = sshll.u32 %s4, 4
      %s258 = int_to_ptr.hbm [resolvable:$true] %s257
      %263 = dma.vmem_to_hbm [thread:$0]  %s256, 256, %s258, [#allocation4], 128, 128, 8
    $region37: #{tpu_custom_call.1} parent=1 // pred_fallthru
      _
    // Predicated region
    $region38: #{tpu_custom_call.1} parent=1 // pred_check
      _
    $region39: #{tpu_custom_call.1} parent=1 // pred_check_branch
      %265 = sbr.rel (0) target = $region41
    $region40: #{tpu_custom_call.1} parent=1 // pred_region
      %267 = dma.done [#allocation4], 256
    $region41: #{tpu_custom_call.1} parent=1 // pred_fallthru
      _
    %268 = vsyncpa [#allocation3], 1
    %269 = vsyncpa [#allocation4], 1

</llo_original>
